<compile_context>
chip_gen: v6e
topology: v6e:2x2x1
jax: 0.10.0
libtpu: 0.0.40
codegen_flags: <defaults>
</compile_context>

<pallas_src>
import functools

import jax
import jax.numpy as jnp
from jax import lax
from jax.experimental import pallas as pl
from jax.experimental.pallas import tpu as pltpu


def _round_up(x, m):
    return ((x + m - 1) // m) * m


# ----------------------------------------------------------------------------
# Pallas kernel: one batch block per grid step, whole sequence in VMEM.
# ----------------------------------------------------------------------------
def _temporal_block_kernel(x_ref, w1_ref, b1_ref, w2_ref, b2_ref, out_ref, *,
                           K, d, pad, L, B_blk, Cout_p,
                           fuse_downsample, wrapper_im2col):
    M = B_blk * L

    w1 = w1_ref[...]                      # (C1, W1cols) bf16
    b1 = b1_ref[...]                      # (1, W1cols)  f32
    w2 = w2_ref[...]                      # (K*Cout_p, Cout_p) bf16
    b2 = b2_ref[...]                      # (1, Cout_p) f32

    # ---- conv1 lhs (im2col) --------------------------------------------------
    if wrapper_im2col:
        # x block already im2col'd in the wrapper: (B_blk, L, C1p),
        # taps stored in REVERSED order so lanes [0:Cin] hold x[t] (current time).
        x = x_ref[...]
        lhs1 = x.reshape(M, x.shape[-1])
    else:
        # x block is causally left-padded: (B_blk, pad+L, Cin_p).
        xp = x_ref[...]
        lhs1 = jnp.concatenate(
            [xp[:, k * d:k * d + L, :] for k in range(K)], axis=-1
        ).reshape(M, -1)

    # ---- conv1 (+ fused 1x1 downsample in the extra Cout_p columns) ----------
    y1 = jnp.dot(lhs1, w1, preferred_element_type=jnp.float32) + b1
    if fuse_downsample:
        h1 = jnp.maximum(y1[:, :Cout_p], 0.0)        # relu1(conv1(x))
        res = y1[:, Cout_p:]                          # downsample(x), f32
    else:
        h1 = jnp.maximum(y1, 0.0)
        if wrapper_im2col:
            # identity residual: lanes [0:Cin] of lhs1 are x[t]; lanes beyond
            # the real channel count are junk that gets sliced off in the wrapper.
            res = lhs1[:, :Cout_p].astype(jnp.float32)
        else:
            res = xp[:, pad:, :].reshape(M, -1).astype(jnp.float32)
    # TODO(synk): training-mode dropout not implemented (identity in eval mode).

    # ---- conv2: causal taps of h1 built directly (no VMEM scratch) -----------
    h1b = h1.astype(w2.dtype).reshape(B_blk, L, Cout_p)
    taps = []
    for k in range(K):
        shift = pad - k * d                           # leading zero rows of this tap
        if shift <= 0:
            taps.append(h1b)
        elif shift >= L:
            taps.append(jnp.zeros_like(h1b))
        else:
            taps.append(jnp.concatenate(
                [jnp.zeros((B_blk, shift, Cout_p), h1b.dtype),
                 h1b[:, :L - shift, :]], axis=1))
    lhs2 = jnp.concatenate(taps, axis=-1).reshape(M, K * Cout_p)
    h2 = jnp.maximum(
        jnp.dot(lhs2, w2, preferred_element_type=jnp.float32) + b2, 0.0)

    # ---- residual add + final ReLU, bf16 store --------------------------------
    out = jnp.maximum(h2 + res, 0.0)
    out_ref[...] = out.reshape(B_blk, L, Cout_p).astype(out_ref.dtype)


# ----------------------------------------------------------------------------
# Wrapper: NCL <-> NLC plumbing, channel padding, weight folding + pallas_call
# ----------------------------------------------------------------------------
def temporal_block_pallas(x_ncl, params, *, kernel_size, dilation, padding,
                          batch_block=1, compute_dtype=jnp.bfloat16):
    N, Cin, L = x_ncl.shape
    Cout = params["w1"].shape[0]
    K, d, pad = kernel_size, dilation, padding
    assert pad == d * (K - 1), "TCN causal-padding assumption"
    assert N % batch_block == 0

    Cin_p = max(128, _round_up(Cin, 128))
    Cout_p = max(128, _round_up(Cout, 128))
    has_downsample = params.get("wd") is not None
    if not has_downsample:
        assert Cin == Cout and Cin_p == Cout_p

    # Small-channel fast path: do conv1's im2col in the wrapper, packing the K
    # dilated taps densely into a single 128-lane block (taps reversed so that
    # lanes [0:Cin] hold the current-time sample, used by the fused downsample
    # / identity residual).
    wrapper_im2col = (K * Cin <= 128)

    x_nlc = jnp.transpose(x_ncl, (0, 2, 1)).astype(compute_dtype)   # (N, L, Cin)

    if wrapper_im2col:
        C1 = 128
        x_t = jnp.pad(x_nlc, ((0, 0), (pad, 0), (0, 0)))             # causal left pad
        taps = [x_t[:, k * d:k * d + L, :] for k in range(K)]        # k = 0..K-1
        lhs1 = jnp.concatenate(taps[::-1], axis=-1)                  # tap K-1 first
        x_in = jnp.zeros((N, L, C1), compute_dtype).at[:, :, :K * Cin].set(lhs1)
        time_len = L

        def row_of_tap(k):
            return (K - 1 - k) * Cin
    else:
        C1 = K * Cin_p
        x_in = jnp.zeros((N, pad + L, Cin_p), compute_dtype)
        x_in = x_in.at[:, pad:, :Cin].set(x_nlc)
        time_len = pad + L

        def row_of_tap(k):
            return k * Cin_p

    # ---- fold weights (weight_norm already folded into effective weights) ----
    W1cols = 2 * Cout_p if has_downsample else Cout_p
    w1_f = jnp.zeros((C1, W1cols), compute_dtype)
    for k in range(K):
        r = row_of_tap(k)
        w1_f = w1_f.at[r:r + Cin, :Cout].set(
            params["w1"][:, :, k].T.astype(compute_dtype))
    b1_f = jnp.zeros((1, W1cols), jnp.float32).at[0, :Cout].set(
        params["b1"].astype(jnp.float32))
    if has_downsample:
        r = row_of_tap(K - 1)                      # "current time" tap block
        w1_f = w1_f.at[r:r + Cin, Cout_p:Cout_p + Cout].set(
            params["wd"][:, :, 0].T.astype(compute_dtype))
        b1_f = b1_f.at[0, Cout_p:Cout_p + Cout].set(
            params["bd"].astype(jnp.float32))

    w2_f = jnp.zeros((K * Cout_p, Cout_p), compute_dtype)
    for k in range(K):
        w2_f = w2_f.at[k * Cout_p:k * Cout_p + Cout, :Cout].set(
            params["w2"][:, :, k].T.astype(compute_dtype))
    b2_f = jnp.zeros((1, Cout_p), jnp.float32).at[0, :Cout].set(
        params["b2"].astype(jnp.float32))

    inputs = [x_in, w1_f, b1_f, w2_f, b2_f]
    in_specs = [
        pl.BlockSpec((batch_block, time_len, x_in.shape[-1]), lambda n: (n, 0, 0)),
        pl.BlockSpec((C1, W1cols), lambda n: (0, 0)),
        pl.BlockSpec((1, W1cols), lambda n: (0, 0)),
        pl.BlockSpec((K * Cout_p, Cout_p), lambda n: (0, 0)),
        pl.BlockSpec((1, Cout_p), lambda n: (0, 0)),
    ]

    kernel = functools.partial(
        _temporal_block_kernel, K=K, d=d, pad=pad, L=L, B_blk=batch_block,
        Cout_p=Cout_p, fuse_downsample=has_downsample,
        wrapper_im2col=wrapper_im2col)

    # ---- VMEM budget (double-buffered blocks + weights + in-kernel temps) ----
    itemsz = jnp.dtype(compute_dtype).itemsize
    M = batch_block * L
    weight_bytes = sum(int(a.size) * a.dtype.itemsize for a in inputs[1:])
    temp_bytes = (M * C1 * itemsz                 # lhs1
                  + M * K * Cout_p * itemsz       # lhs2
                  + M * W1cols * 4                # y1 (f32)
                  + 2 * M * Cout_p * 4)           # h1 / h2 (f32)
    est_vmem = (2 * batch_block * time_len * x_in.shape[-1] * itemsz   # x block x2
                + 2 * weight_bytes                                     # weights x2
                + 2 * M * Cout_p * itemsz                              # bf16 out x2
                + temp_bytes)
    try:
        vmem_cap = int(pltpu.get_tpu_info().vmem_capacity_bytes)
    except Exception:
        vmem_cap = 128 * 1024 * 1024
    # ~80% of physical VMEM max (keeps headroom for Mosaic scratch on v7x's
    # 64 MiB, while allowing >64 MiB tiles on v5e/v6e's 128 MiB).
    vmem_limit = int(min(int(0.8 * vmem_cap),
                         max(16 * 1024 * 1024, 4 * est_vmem)))

    flops = 2 * N * L * (C1 * W1cols + K * Cout_p * Cout_p)
    bytes_accessed = (sum(int(a.size) * a.dtype.itemsize for a in inputs)
                      + N * L * Cout_p * itemsz)                        # bf16 output

    out_nlc = pl.pallas_call(
        kernel,
        out_shape=jax.ShapeDtypeStruct((N, L, Cout_p), compute_dtype),
        grid_spec=pltpu.PrefetchScalarGridSpec(
            num_scalar_prefetch=0,
            grid=(N // batch_block,),
            in_specs=in_specs,
            out_specs=pl.BlockSpec((batch_block, L, Cout_p),
                                   lambda n: (n, 0, 0)),
        ),
        compiler_params=pltpu.CompilerParams(
            dimension_semantics=("parallel",),
            vmem_limit_bytes=vmem_limit),
        cost_estimate=pl.CostEstimate(flops=int(flops), transcendentals=0,
                                      bytes_accessed=int(bytes_accessed)),
    )(*inputs)

    # slice off channel padding, back to NCL
    return jnp.transpose(out_nlc[:, :, :Cout], (0, 2, 1))


# ----------------------------------------------------------------------------
# Pure-JAX reference (f32 lax.conv) for validation
# ----------------------------------------------------------------------------
def _conv1d_ref(x_ncl, w_oik, b, dilation, padding):
    out = lax.conv_general_dilated(
        x_ncl, w_oik, window_strides=(1,), padding=[(padding, padding)],
        rhs_dilation=(dilation,), dimension_numbers=("NCH", "OIH", "NCH"))
    return out + b[None, :, None]


def temporal_block_ref(x_ncl, params, *, kernel_size, dilation, padding):
    L = x_ncl.shape[-1]
    h = _conv1d_ref(x_ncl, params["w1"], params["b1"], dilation, padding)
    h = jnp.maximum(h[:, :, :L], 0.0)                  # chomp (safe for pad==0 too)
    h = _conv1d_ref(h, params["w2"], params["b2"], dilation, padding)
    h = jnp.maximum(h[:, :, :L], 0.0)
    if params.get("wd") is not None:
        res = _conv1d_ref(x_ncl, params["wd"], params["bd"], 1, 0)
    else:
        res = x_ncl
    return jnp.maximum(h + res, 0.0)


# ----------------------------------------------------------------------------
# Deterministic parameter init (weight_norm folded into effective weights)
# ----------------------------------------------------------------------------
def _weight_norm(v, g):
    # PyTorch weight_norm default dim=0: per-output-channel norm over (Cin, K)
    norm = jnp.sqrt(jnp.sum(v * v, axis=(1, 2), keepdims=True))
    return g[:, None, None] * v / norm


def init_params(key, n_inputs, n_outputs, kernel_size):
    ks = jax.random.split(key, 8)
    v1 = 0.1 * jax.random.normal(ks[0], (n_outputs, n_inputs, kernel_size), jnp.float32)
    g1 = jax.random.uniform(ks[1], (n_outputs,), jnp.float32, 0.5, 1.5)
    v2 = 0.1 * jax.random.normal(ks[2], (n_outputs, n_outputs, kernel_size), jnp.float32)
    g2 = jax.random.uniform(ks[3], (n_outputs,), jnp.float32, 0.5, 1.5)
    params = {
        "w1": _weight_norm(v1, g1),
        "b1": 0.1 * jax.random.normal(ks[4], (n_outputs,), jnp.float32),
        "w2": _weight_norm(v2, g2),
        "b2": 0.1 * jax.random.normal(ks[5], (n_outputs,), jnp.float32),
    }
    if n_inputs != n_outputs:
        params["wd"] = 0.2 * jax.random.normal(ks[6], (n_outputs, n_inputs, 1), jnp.float32)
        params["bd"] = 0.1 * jax.random.normal(ks[7], (n_outputs,), jnp.float32)
    else:
        params["wd"] = None
        params["bd"] = None
    return params


if __name__ == "__main__":
    # Module config: n_inputs=4, n_outputs=8, kernel_size=3, stride=1,
    # dilation=2, padding=(kernel_size-1)*dilation=4, dropout=0.2 (eval), bool_bn=False
    N, C_IN, C_OUT, L = 2, 4, 8, 16
    K, DIL = 3, 2
    PAD = (K - 1) * DIL

    key = jax.random.PRNGKey(0)
    k_x, k_p = jax.random.split(key)
    x = jax.random.normal(k_x, (N, C_IN, L), jnp.float32)     # NCL, like PyTorch
    params = init_params(k_p, C_IN, C_OUT, K)

    out = temporal_block_pallas(x, params, kernel_size=K, dilation=DIL, padding=PAD)
    out = jax.block_until_ready(out)

    ref = temporal_block_ref(x, params, kernel_size=K, dilation=DIL, padding=PAD)
    assert out.shape == (N, C_OUT, L)
    # bf16 operands + bf16 output store (intentional, per perf review) with f32
    # accumulation: tolerance is loosened accordingly vs. the pure-f32 reference.
    assert jnp.allclose(out.astype(jnp.float32), ref, atol=1e-1, rtol=1e-1), \
        "mismatch vs. reference"

    print("KERNEL_OK")
</pallas_src>

<mosaic_0001>
module attributes {stable_mosaic.version = 11 : i64} {
  func.func @_temporal_block_kernel(%arg0: i32, %arg1: memref<1x16x128xbf16, #tpu.memory_space<vmem>>, %arg2: memref<128x256xbf16, #tpu.memory_space<vmem>>, %arg3: memref<1x256xf32, #tpu.memory_space<vmem>>, %arg4: memref<384x128xbf16, #tpu.memory_space<vmem>>, %arg5: memref<1x128xf32, #tpu.memory_space<vmem>>, %arg6: memref<1x16x128xbf16, #tpu.memory_space<vmem>>) attributes {dimension_semantics = [#tpu.dimension_semantics<parallel>], iteration_bounds = array<i64: 2>, scalar_prefetch = 0 : i64, scratch_operands = 0 : i64, tpu.core_type = #tpu.core_type<tc>, window_params = [{transform_indices = @transform_0, window_bounds = array<i64: 1, 16, 128>}, {pipeline_mode = #tpu.pipeline_mode<synchronous>, transform_indices = @transform_1, window_bounds = array<i64: 128, 256>}, {pipeline_mode = #tpu.pipeline_mode<synchronous>, transform_indices = @transform_2, window_bounds = array<i64: 1, 256>}, {pipeline_mode = #tpu.pipeline_mode<synchronous>, transform_indices = @transform_3, window_bounds = array<i64: 384, 128>}, {pipeline_mode = #tpu.pipeline_mode<synchronous>, transform_indices = @transform_4, window_bounds = array<i64: 1, 128>}, {transform_indices = @transform_5, window_bounds = array<i64: 1, 16, 128>}]} {
    %c0 = arith.constant 0 : index
    %c0_0 = arith.constant 0 : index
    %0 = vector.load %arg2[%c0, %c0_0] : memref<128x256xbf16, #tpu.memory_space<vmem>>, vector<128x256xbf16>
    %c0_1 = arith.constant 0 : index
    %c0_2 = arith.constant 0 : index
    %1 = vector.load %arg3[%c0_1, %c0_2] : memref<1x256xf32, #tpu.memory_space<vmem>>, vector<1x256xf32>
    %c0_3 = arith.constant 0 : index
    %c0_4 = arith.constant 0 : index
    %2 = vector.load %arg4[%c0_3, %c0_4] : memref<384x128xbf16, #tpu.memory_space<vmem>>, vector<384x128xbf16>
    %c0_5 = arith.constant 0 : index
    %c0_6 = arith.constant 0 : index
    %3 = vector.load %arg5[%c0_5, %c0_6] : memref<1x128xf32, #tpu.memory_space<vmem>>, vector<1x128xf32>
    %c0_7 = arith.constant 0 : index
    %c0_8 = arith.constant 0 : index
    %c0_9 = arith.constant 0 : index
    %4 = vector.load %arg1[%c0_7, %c0_8, %c0_9] : memref<1x16x128xbf16, #tpu.memory_space<vmem>>, vector<1x16x128xbf16>
    %5 = vector.shape_cast %4 : vector<1x16x128xbf16> to vector<16x128xbf16>
    %cst = arith.constant dense<0.000000e+00> : vector<16x256xf32>
    %6 = tpu.matmul %5, %0, %cst {dimension_numbers = #tpu.dot_dimension_numbers<[1], [0], [0], [1], [0, 0, 1, 1], [], []>} : vector<16x128xbf16>, vector<128x256xbf16>, vector<16x256xf32> -> vector<16x256xf32>
    %7 = vector.broadcast %1 : vector<1x256xf32> to vector<16x256xf32>
    %8 = arith.addf %6, %7 : vector<16x256xf32>
    %9 = vector.extract_strided_slice %8 {offsets = [0, 0], sizes = [16, 128], strides = [1, 1]} : vector<16x256xf32> to vector<16x128xf32>
    %cst_10 = arith.constant 0.000000e+00 : f32
    %10 = vector.broadcast %cst_10 : f32 to vector<16x128xf32>
    %11 = arith.maximumf %9, %10 : vector<16x128xf32>
    %12 = vector.extract_strided_slice %8 {offsets = [0, 128], sizes = [16, 128], strides = [1, 1]} : vector<16x256xf32> to vector<16x128xf32>
    %13 = arith.truncf %11 : vector<16x128xf32> to vector<16x128xbf16>
    %14 = vector.shape_cast %13 : vector<16x128xbf16> to vector<1x16x128xbf16>
    %cst_11 = arith.constant 0.000000e+00 : bf16
    %15 = vector.broadcast %cst_11 : bf16 to vector<1x4x128xbf16>
    %16 = vector.extract_strided_slice %14 {offsets = [0, 0, 0], sizes = [1, 12, 128], strides = [1, 1, 1]} : vector<1x16x128xbf16> to vector<1x12x128xbf16>
    %17 = tpu.concatenate %15, %16 in 1 : vector<1x4x128xbf16>, vector<1x12x128xbf16> -> vector<1x16x128xbf16>
    %cst_12 = arith.constant 0.000000e+00 : bf16
    %18 = vector.broadcast %cst_12 : bf16 to vector<1x2x128xbf16>
    %19 = vector.extract_strided_slice %14 {offsets = [0, 0, 0], sizes = [1, 14, 128], strides = [1, 1, 1]} : vector<1x16x128xbf16> to vector<1x14x128xbf16>
    %20 = tpu.concatenate %18, %19 in 1 : vector<1x2x128xbf16>, vector<1x14x128xbf16> -> vector<1x16x128xbf16>
    %21 = tpu.concatenate %17, %20, %14 in 2 : vector<1x16x128xbf16>, vector<1x16x128xbf16>, vector<1x16x128xbf16> -> vector<1x16x384xbf16>
    %22 = vector.shape_cast %21 : vector<1x16x384xbf16> to vector<16x384xbf16>
    %cst_13 = arith.constant dense<0.000000e+00> : vector<16x128xf32>
    %23 = tpu.matmul %22, %2, %cst_13 {dimension_numbers = #tpu.dot_dimension_numbers<[1], [0], [0], [1], [0, 0, 1, 1], [], []>} : vector<16x384xbf16>, vector<384x128xbf16>, vector<16x128xf32> -> vector<16x128xf32>
    %24 = vector.broadcast %3 : vector<1x128xf32> to vector<16x128xf32>
    %25 = arith.addf %23, %24 : vector<16x128xf32>
    %cst_14 = arith.constant 0.000000e+00 : f32
    %26 = vector.broadcast %cst_14 : f32 to vector<16x128xf32>
    %27 = arith.maximumf %25, %26 : vector<16x128xf32>
    %28 = arith.addf %27, %12 : vector<16x128xf32>
    %cst_15 = arith.constant 0.000000e+00 : f32
    %29 = vector.broadcast %cst_15 : f32 to vector<16x128xf32>
    %30 = arith.maximumf %28, %29 : vector<16x128xf32>
    %31 = vector.shape_cast %30 : vector<16x128xf32> to vector<1x16x128xf32>
    %32 = arith.truncf %31 : vector<1x16x128xf32> to vector<1x16x128xbf16>
    %c0_16 = arith.constant 0 : index
    %c0_17 = arith.constant 0 : index
    %c0_18 = arith.constant 0 : index
    %33 = vector.load %arg6[%c0_16, %c0_17, %c0_18] : memref<1x16x128xbf16, #tpu.memory_space<vmem>>, vector<1x16x128xbf16>
    tpu.vector_store %arg6[%c0_16, %c0_17, %c0_18], %32 {strides = array<i32>} : memref<1x16x128xbf16, #tpu.memory_space<vmem>>, vector<1x16x128xbf16>,
    return
  }
  func.func @transform_0(%arg0: i32) -> (i32, i32, i32) {
    %c0_i32 = arith.constant 0 : i32
    %c0_i32_0 = arith.constant 0 : i32
    %c0_i32_1 = arith.constant 0 : i32
    return %arg0, %c0_i32, %c0_i32_0 : i32, i32, i32
  }
  func.func @transform_1(%arg0: i32) -> (i32, i32) {
    %c0_i32 = arith.constant 0 : i32
    %c0_i32_0 = arith.constant 0 : i32
    %c0_i32_1 = arith.constant 0 : i32
    return %c0_i32, %c0_i32_0 : i32, i32
  }
  func.func @transform_2(%arg0: i32) -> (i32, i32) {
    %c0_i32 = arith.constant 0 : i32
    %c0_i32_0 = arith.constant 0 : i32
    %c0_i32_1 = arith.constant 0 : i32
    return %c0_i32, %c0_i32_0 : i32, i32
  }
  func.func @transform_3(%arg0: i32) -> (i32, i32) {
    %c0_i32 = arith.constant 0 : i32
    %c0_i32_0 = arith.constant 0 : i32
    %c0_i32_1 = arith.constant 0 : i32
    return %c0_i32, %c0_i32_0 : i32, i32
  }
  func.func @transform_4(%arg0: i32) -> (i32, i32) {
    %c0_i32 = arith.constant 0 : i32
    %c0_i32_0 = arith.constant 0 : i32
    %c0_i32_1 = arith.constant 0 : i32
    return %c0_i32, %c0_i32_0 : i32, i32
  }
  func.func @transform_5(%arg0: i32) -> (i32, i32, i32) {
    %c0_i32 = arith.constant 0 : i32
    %c0_i32_0 = arith.constant 0 : i32
    %c0_i32_1 = arith.constant 0 : i32
    return %arg0, %c0_i32, %c0_i32_0 : i32, i32, i32
  }
}

</mosaic_0001>

<llo_original>
// kernel: tpu_custom_call.1
$region0: #{tpu_custom_call.1}
  #allocation0 [shape = 'u32[]', space=smem, size = 0x4, offset = 0x4, fixed_abs, tag = 'smem constant byte address 0x4 - core index']
  #allocation1 [shape = 'u32[144,128]{1,0:T(1,128)}', space=vmem, size = 0x12000, scoped, tag = 'internal scratch']
  %s0 = inlined_call_operand.hbm [shape: bf16[2,16,128], index: 0, kind: input, shape index: {}]
  %s1 = inlined_call_operand.hbm [shape: bf16[128,256], index: 1, kind: input, shape index: {}]
  %s2 = inlined_call_operand.vmem [shape: f32[1,256], index: 2, kind: input, shape index: {}]
  %s3 = inlined_call_operand.hbm [shape: bf16[384,128], index: 3, kind: input, shape index: {}]
  %s4 = inlined_call_operand.vmem [shape: f32[1,128], index: 4, kind: input, shape index: {}]
  %s5 = inlined_call_operand.hbm [shape: bf16[2,16,128], index: 5, kind: output, shape index: {}]
  %s6 = sld [smem:[#allocation0]]
  $region65: #{tpu_custom_call.1} parent=0
    _
  %s8 = ssub.s32 1, %s6
  %s9 = scalar_select 0, %s8, %s6
  $region1: #{tpu_custom_call.1} parent=0
    #allocation2 [shape = 'u8[8192]{0}', space=vmem, size = 0x2000, scoped, tag = 'input window, operand 0']
    #allocation3 [shape = 's32[2]{0}', space=sflag, size = 0x8, scoped, tag = 'scoped memory for tpu_custom_call.1']
    #allocation4 [shape = 's32[2]{0}', space=sflag, size = 0x8, scoped, tag = 'scoped memory for tpu_custom_call.1']
    #allocation5 [shape = 'u8[65536]{0}', space=vmem, size = 0x10000, scoped, tag = 'input window, operand 1, single buffered']
    #allocation6 [shape = 's32[1]{0}', space=sflag, size = 0x4, scoped, tag = 'scoped memory for tpu_custom_call.1']
    #allocation7 [shape = 'u8[98304]{0}', space=vmem, size = 0x18000, scoped, tag = 'input window, operand 3, single buffered']
    #allocation8 [shape = 'u8[8192]{0}', space=vmem, size = 0x2000, scoped, tag = 'output window, operand 0']
    %10 = vsyncpa [#allocation3], 0
    %s11 = scalar_lea.sflag [#allocation3], 1
    %12 = vsyncpa %s11, 0
    %13 = vsyncpa [#allocation6], 0
    %14 = vsyncpa [#allocation4], 0
    %s15 = scalar_lea.sflag [#allocation4], 1
    %16 = vsyncpa %s15, 0
    loop: start=0, step=1, limit=4
    $region2: #{tpu_custom_call.1} parent=1 // loop_pre_header
      _
    $region3: #{tpu_custom_call.1} parent=1 // loop_header
      %s18 = sphi 0, %s22
      %p19 = scmp.ge.s32.totalorder %s18, 4
      %s28 = sphi 0, %s30
      %s31 = sphi 0, %s28
      %s32 = sphi 0, %s31
      %s48 = sphi 0, %s32
      %s52 = sphi 0, %s52
      %s54 = sphi 0, %s52
      %s55 = sphi 0, %s54
      %s69 = sphi 0, %s55
      %s73 = sphi 0, %s73
      %s75 = sphi 0, %s73
      %s76 = sphi 0, %s75
      %s90 = sphi 0, %s76
      %s94 = sphi 0, %s94
      %s96 = sphi 0, %s94
      %s97 = sphi 0, %s96
      %s111 = sphi 0, %s97
      %s115 = sphi 0, %s115
      %s117 = sphi 0, %s115
      %s118 = sphi 0, %s117
      %s132 = sphi 0, %s118
      %s138 = sphi 0, %s140
      %s141 = sphi 0, %s138
      %s142 = sphi 0, %s141
      %s158 = sphi 0, %s142
    $region4: #{tpu_custom_call.1} parent=1 // loop_header_branch
      %21 = sbr.rel (%p19) target = $region8
    $region5: #{tpu_custom_call.1} parent=1 // loop_body
      %s23 = ssub.s32 %s18, 1
      %s24 = ssub.s32 %s18, 2
      %s25 = sadd.s32 %s18, 1
      %s26 = ssub.s32 %s18, %s25
      %p27 = scmp.eq.s32.totalorder %s26, 0
      %s29 = sadd.s32 %s28, 1
      %s30 = scalar_select %p27, %s28, %s29
      %p33 = pneg %p27
      %p34 = scmp.eq.s32.totalorder %s18, 1
      %p35 = por %p33, %p34
      %p36 = scmp.ne.s32.totalorder %s28, %s31
      %p37 = scmp.eq.s32.totalorder %s18, 0
      %p38 = por %p36, %p37
      %p39 = scmp.ne.s32.totalorder %s28, %s31
      %p40 = scmp.eq.s32.totalorder %s23, 1
      %p41 = por %p39, %p40
      %p42 = scmp.ne.s32.totalorder %s31, %s32
      %p43 = scmp.eq.s32.totalorder %s23, 0
      %p44 = por %p42, %p43
      %p45 = scmp.ne.s32.totalorder %s31, %s32
      %p46 = scmp.eq.s32.totalorder %s24, 1
      %p47 = por %p45, %p46
      %p49 = scmp.ne.s32.totalorder %s32, %s48
      %p50 = scmp.eq.s32.totalorder %s24, 0
      %p51 = por %p49, %p50
      %s53 = sadd.s32 %s52, 1
      %p56 = scmp.eq.s32.totalorder %s18, 1
      %p57 = scmp.ne.s32.totalorder %s52, %s54
      %p58 = scmp.eq.s32.totalorder %s18, 0
      %p59 = por %p57, %p58
      %p60 = scmp.ne.s32.totalorder %s52, %s54
      %p61 = scmp.eq.s32.totalorder %s23, 1
      %p62 = por %p60, %p61
      %p63 = scmp.ne.s32.totalorder %s54, %s55
      %p64 = scmp.eq.s32.totalorder %s23, 0
      %p65 = por %p63, %p64
      %p66 = scmp.ne.s32.totalorder %s54, %s55
      %p67 = scmp.eq.s32.totalorder %s24, 1
      %p68 = por %p66, %p67
      %p70 = scmp.ne.s32.totalorder %s55, %s69
      %p71 = scmp.eq.s32.totalorder %s24, 0
      %p72 = por %p70, %p71
      %s74 = sadd.s32 %s73, 1
      %p77 = scmp.eq.s32.totalorder %s18, 1
      %p78 = scmp.ne.s32.totalorder %s73, %s75
      %p79 = scmp.eq.s32.totalorder %s18, 0
      %p80 = por %p78, %p79
      %p81 = scmp.ne.s32.totalorder %s73, %s75
      %p82 = scmp.eq.s32.totalorder %s23, 1
      %p83 = por %p81, %p82
      %p84 = scmp.ne.s32.totalorder %s75, %s76
      %p85 = scmp.eq.s32.totalorder %s23, 0
      %p86 = por %p84, %p85
      %p87 = scmp.ne.s32.totalorder %s75, %s76
      %p88 = scmp.eq.s32.totalorder %s24, 1
      %p89 = por %p87, %p88
      %p91 = scmp.ne.s32.totalorder %s76, %s90
      %p92 = scmp.eq.s32.totalorder %s24, 0
      %p93 = por %p91, %p92
      %s95 = sadd.s32 %s94, 1
      %p98 = scmp.eq.s32.totalorder %s18, 1
      %p99 = scmp.ne.s32.totalorder %s94, %s96
      %p100 = scmp.eq.s32.totalorder %s18, 0
      %p101 = por %p99, %p100
      %p102 = scmp.ne.s32.totalorder %s94, %s96
      %p103 = scmp.eq.s32.totalorder %s23, 1
      %p104 = por %p102, %p103
      %p105 = scmp.ne.s32.totalorder %s96, %s97
      %p106 = scmp.eq.s32.totalorder %s23, 0
      %p107 = por %p105, %p106
      %p108 = scmp.ne.s32.totalorder %s96, %s97
      %p109 = scmp.eq.s32.totalorder %s24, 1
      %p110 = por %p108, %p109
      %p112 = scmp.ne.s32.totalorder %s97, %s111
      %p113 = scmp.eq.s32.totalorder %s24, 0
      %p114 = por %p112, %p113
      %s116 = sadd.s32 %s115, 1
      %p119 = scmp.eq.s32.totalorder %s18, 1
      %p120 = scmp.ne.s32.totalorder %s115, %s117
      %p121 = scmp.eq.s32.totalorder %s18, 0
      %p122 = por %p120, %p121
      %p123 = scmp.ne.s32.totalorder %s115, %s117
      %p124 = scmp.eq.s32.totalorder %s23, 1
      %p125 = por %p123, %p124
      %p126 = scmp.ne.s32.totalorder %s117, %s118
      %p127 = scmp.eq.s32.totalorder %s23, 0
      %p128 = por %p126, %p127
      %p129 = scmp.ne.s32.totalorder %s117, %s118
      %p130 = scmp.eq.s32.totalorder %s24, 1
      %p131 = por %p129, %p130
      %p133 = scmp.ne.s32.totalorder %s118, %s132
      %p134 = scmp.eq.s32.totalorder %s24, 0
      %p135 = por %p133, %p134
      %s136 = ssub.s32 %s18, %s25
      %p137 = scmp.eq.s32.totalorder %s136, 0
      %s139 = sadd.s32 %s138, 1
      %s140 = scalar_select %p137, %s138, %s139
      %p143 = pneg %p137
      %p144 = scmp.eq.s32.totalorder %s18, 1
      %p145 = por %p143, %p144
      %p146 = scmp.ne.s32.totalorder %s138, %s141
      %p147 = scmp.eq.s32.totalorder %s18, 0
      %p148 = por %p146, %p147
      %p149 = scmp.ne.s32.totalorder %s138, %s141
      %p150 = scmp.eq.s32.totalorder %s23, 1
      %p151 = por %p149, %p150
      %p152 = scmp.ne.s32.totalorder %s141, %s142
      %p153 = scmp.eq.s32.totalorder %s23, 0
      %p154 = por %p152, %p153
      %p155 = scmp.ne.s32.totalorder %s141, %s142
      %p156 = scmp.eq.s32.totalorder %s24, 1
      %p157 = por %p155, %p156
      %p159 = scmp.ne.s32.totalorder %s142, %s158
      %p160 = scmp.eq.s32.totalorder %s24, 0
      %p161 = por %p159, %p160
      %p162 = scmp.le.s32.totalorder 1, %s18
      %p163 = scmp.lt.s32.totalorder %s18, 3
      %p164 = pnand %p162, %p163
      %p165 = pneg %p164
      // Predicated region
      $region9: #{tpu_custom_call.1} parent=5 // pred_check
        _
      $region10: #{tpu_custom_call.1} parent=5 // pred_check_branch
        %167 = sbr.rel (%p164) target = $region12
      $region11: #{tpu_custom_call.1} parent=5 // pred_region
        %s168 = ssub.s32 %s18, 1
        // Predicated region
        $region13: #{tpu_custom_call.1} parent=11 // pred_check
          %p169 = pneg %p65
        $region14: #{tpu_custom_call.1} parent=11 // pred_check_branch
          %171 = sbr.rel (%p169) target = $region16
        $region15: #{tpu_custom_call.1} parent=11 // pred_region
          %s173 = ssub.s32 2048, 2048
          %174 = vsyncadd [#allocation6], %s173
          %s175 = sshll.u32 [#allocation5], 4
          %s176 = int_to_ptr.vmem [resolvable:$true] %s175
          %181 = dma.hbm_to_vmem [thread:$0]  %s1, 2048, %s176, [#allocation6], 128, 128, 8
        $region16: #{tpu_custom_call.1} parent=11 // pred_fallthru
          _
        // Predicated region
        $region17: #{tpu_custom_call.1} parent=11 // pred_check
          %p182 = pneg %p86
        $region18: #{tpu_custom_call.1} parent=11 // pred_check_branch
          %184 = sbr.rel (%p182) target = $region20
        $region19: #{tpu_custom_call.1} parent=11 // pred_region
          _
        $region20: #{tpu_custom_call.1} parent=11 // pred_fallthru
          _
        // Predicated region
        $region21: #{tpu_custom_call.1} parent=11 // pred_check
          %p185 = pneg %p107
        $region22: #{tpu_custom_call.1} parent=11 // pred_check_branch
          %187 = sbr.rel (%p185) target = $region24
        $region23: #{tpu_custom_call.1} parent=11 // pred_region
          %s189 = ssub.s32 3072, 3072
          %190 = vsyncadd [#allocation6], %s189
          %s191 = sshll.u32 [#allocation7], 4
          %s192 = int_to_ptr.vmem [resolvable:$true] %s191
          %197 = dma.hbm_to_vmem [thread:$0]  %s3, 3072, %s192, [#allocation6], 64, 64, 4
        $region24: #{tpu_custom_call.1} parent=11 // pred_fallthru
          _
        // Predicated region
        $region25: #{tpu_custom_call.1} parent=11 // pred_check
          %p198 = pneg %p128
        $region26: #{tpu_custom_call.1} parent=11 // pred_check_branch
          %200 = sbr.rel (%p198) target = $region28
        $region27: #{tpu_custom_call.1} parent=11 // pred_region
          _
        $region28: #{tpu_custom_call.1} parent=11 // pred_fallthru
          _
      $region12: #{tpu_custom_call.1} parent=5 // pred_fallthru
        _
      %p201 = scmp.lt.s32.totalorder %s18, 2
      // Predicated region
      $region29: #{tpu_custom_call.1} parent=5 // pred_check
        %p202 = pneg %p201
      $region30: #{tpu_custom_call.1} parent=5 // pred_check_branch
        %204 = sbr.rel (%p202) target = $region32
      $region31: #{tpu_custom_call.1} parent=5 // pred_region
        // Predicated region
        $region33: #{tpu_custom_call.1} parent=31 // pred_check
          %p205 = pneg %p38
        $region34: #{tpu_custom_call.1} parent=31 // pred_check_branch
          %207 = sbr.rel (%p205) target = $region36
        $region35: #{tpu_custom_call.1} parent=31 // pred_region
          %s208 = sand.u32 %s28, 1
          %s209 = scalar_lea.sflag [#allocation3], %s208
          %s210 = sand.u32 %s28, 1
          %s211 = smul.addr %s210, 8
          %s212 = scalar_lea.vmem [#allocation2], %s211
          %s214 = ssub.s32 128, 128
          %215 = vsyncadd %s209, %s214
          %s216 = smul.addr %s18, 2
          %s217 = smul.addr %s216, 64
          %s218 = scalar_lea.hbm %s0, %s217
          %s219 = sshll.u32 %s212, 4
          %s220 = int_to_ptr.vmem [resolvable:$true] %s219
          %225 = dma.hbm_to_vmem [thread:$0]  %s218, 128, %s220, %s209, 64, 64, 4
        $region36: #{tpu_custom_call.1} parent=31 // pred_fallthru
          _
      $region32: #{tpu_custom_call.1} parent=5 // pred_fallthru
        _
      %p226 = scmp.le.s32.totalorder 1, %s18
      %p227 = scmp.lt.s32.totalorder %s18, 3
      %p228 = pnand %p226, %p227
      %p229 = pneg %p228
      // Predicated region
      $region37: #{tpu_custom_call.1} parent=5 // pred_check
        _
      $region38: #{tpu_custom_call.1} parent=5 // pred_check_branch
        %231 = sbr.rel (%p228) target = $region40
      $region39: #{tpu_custom_call.1} parent=5 // pred_region
        %s232 = ssub.s32 %s18, 1
        %s233 = sand.u32 %s31, 1
        %s234 = scalar_lea.sflag [#allocation3], %s233
        %s235 = sand.u32 %s31, 1
        %s236 = smul.addr %s235, 8
        %s237 = scalar_lea.vmem [#allocation2], %s236
        // Predicated region
        $region41: #{tpu_custom_call.1} parent=39 // pred_check
          %p238 = pneg %p44
        $region42: #{tpu_custom_call.1} parent=39 // pred_check_branch
          %240 = sbr.rel (%p238) target = $region44
        $region43: #{tpu_custom_call.1} parent=39 // pred_region
          %241 = dma.done %s234, 128
        $region44: #{tpu_custom_call.1} parent=39 // pred_fallthru
          _
        // Predicated region
        $region45: #{tpu_custom_call.1} parent=39 // pred_check
          %p242 = pneg %p65
        $region46: #{tpu_custom_call.1} parent=39 // pred_check_branch
          %244 = sbr.rel (%p242) target = $region48
        $region47: #{tpu_custom_call.1} parent=39 // pred_region
          %245 = dma.done [#allocation6], 2048
        $region48: #{tpu_custom_call.1} parent=39 // pred_fallthru
          _
        // Predicated region
        $region49: #{tpu_custom_call.1} parent=39 // pred_check
          %p246 = pneg %p107
        $region50: #{tpu_custom_call.1} parent=39 // pred_check_branch
          %248 = sbr.rel (%p246) target = $region52
        $region51: #{tpu_custom_call.1} parent=39 // pred_region
          %249 = dma.done [#allocation6], 3072
        $region52: #{tpu_custom_call.1} parent=39 // pred_fallthru
          _
        %s250 = sand.u32 %s31, 1
        %s251 = scalar_lea.sflag [#allocation3], %s250
        %s252 = sand.u32 %s31, 1
        %s253 = smul.addr %s252, 8
        %s254 = scalar_lea.vmem [#allocation2], %s253
        %p255 = pneg %p44
        %p256 = pneg %p41
        %p257 = pneg %p65
        %p258 = pneg %p62
        %p259 = pneg %p86
        %p260 = pneg %p83
        %p261 = pneg %p107
        %p262 = pneg %p104
        %p263 = pneg %p128
        %p264 = pneg %p125
        %p265 = pneg %p154
        %p266 = pneg %p151
        %s267 = sand.u32 %s141, 1
        %s268 = scalar_lea.sflag [#allocation4], %s267
        %s269 = sand.u32 %s141, 1
        %s270 = smul.addr %s269, 8
        %s271 = scalar_lea.vmem [#allocation8], %s270
        %v273 = vld [vmem:[#allocation5] sm:$0xff]
        %v274 = vld [vmem:[#allocation5 + $0x8] sm:$0xff]
        %v275 = vld [vmem:[#allocation5 + $0x10] sm:$0xff]
        %v276 = vld [vmem:[#allocation5 + $0x18] sm:$0xff]
        %v277 = vld [vmem:[#allocation5 + $0x20] sm:$0xff]
        %v278 = vld [vmem:[#allocation5 + $0x28] sm:$0xff]
        %v279 = vld [vmem:[#allocation5 + $0x30] sm:$0xff]
        %v280 = vld [vmem:[#allocation5 + $0x38] sm:$0xff]
        %v281 = vld [vmem:[#allocation5 + $0x40] sm:$0xff]
        %v282 = vld [vmem:[#allocation5 + $0x48] sm:$0xff]
        %v283 = vld [vmem:[#allocation5 + $0x50] sm:$0xff]
        %v284 = vld [vmem:[#allocation5 + $0x58] sm:$0xff]
        %v285 = vld [vmem:[#allocation5 + $0x60] sm:$0xff]
        %v286 = vld [vmem:[#allocation5 + $0x68] sm:$0xff]
        %v287 = vld [vmem:[#allocation5 + $0x70] sm:$0xff]
        %v288 = vld [vmem:[#allocation5 + $0x78] sm:$0xff]
        %v289 = vld [vmem:[%s2] sm:$0x3]
        %v290 = vld [vmem:[#allocation7] sm:$0xf]
        %v291 = vld [vmem:[#allocation7 + $0x4] sm:$0xf]
        %v292 = vld [vmem:[#allocation7 + $0x8] sm:$0xf]
        %v293 = vld [vmem:[#allocation7 + $0xc] sm:$0xf]
        %v294 = vld [vmem:[#allocation7 + $0x10] sm:$0xf]
        %v295 = vld [vmem:[#allocation7 + $0x14] sm:$0xf]
        %v296 = vld [vmem:[#allocation7 + $0x18] sm:$0xf]
        %v297 = vld [vmem:[#allocation7 + $0x1c] sm:$0xf]
        %v298 = vld [vmem:[#allocation7 + $0x20] sm:$0xf]
        %v299 = vld [vmem:[#allocation7 + $0x24] sm:$0xf]
        %v300 = vld [vmem:[#allocation7 + $0x28] sm:$0xf]
        %v301 = vld [vmem:[#allocation7 + $0x2c] sm:$0xf]
        %v302 = vld [vmem:[#allocation7 + $0x30] sm:$0xf]
        %v303 = vld [vmem:[#allocation7 + $0x34] sm:$0xf]
        %v304 = vld [vmem:[#allocation7 + $0x38] sm:$0xf]
        %v305 = vld [vmem:[#allocation7 + $0x3c] sm:$0xf]
        %v306 = vld [vmem:[#allocation7 + $0x40] sm:$0xf]
        %v307 = vld [vmem:[#allocation7 + $0x44] sm:$0xf]
        %v308 = vld [vmem:[#allocation7 + $0x48] sm:$0xf]
        %v309 = vld [vmem:[#allocation7 + $0x4c] sm:$0xf]
        %v310 = vld [vmem:[#allocation7 + $0x50] sm:$0xf]
        %v311 = vld [vmem:[#allocation7 + $0x54] sm:$0xf]
        %v312 = vld [vmem:[#allocation7 + $0x58] sm:$0xf]
        %v313 = vld [vmem:[#allocation7 + $0x5c] sm:$0xf]
        %v314 = vld [vmem:[#allocation7 + $0x60] sm:$0xf]
        %v315 = vld [vmem:[#allocation7 + $0x64] sm:$0xf]
        %v316 = vld [vmem:[#allocation7 + $0x68] sm:$0xf]
        %v317 = vld [vmem:[#allocation7 + $0x6c] sm:$0xf]
        %v318 = vld [vmem:[#allocation7 + $0x70] sm:$0xf]
        %v319 = vld [vmem:[#allocation7 + $0x74] sm:$0xf]
        %v320 = vld [vmem:[#allocation7 + $0x78] sm:$0xf]
        %v321 = vld [vmem:[#allocation7 + $0x7c] sm:$0xf]
        %v322 = vld [vmem:[#allocation7 + $0x80] sm:$0xf]
        %v323 = vld [vmem:[#allocation7 + $0x84] sm:$0xf]
        %v324 = vld [vmem:[#allocation7 + $0x88] sm:$0xf]
        %v325 = vld [vmem:[#allocation7 + $0x8c] sm:$0xf]
        %v326 = vld [vmem:[#allocation7 + $0x90] sm:$0xf]
        %v327 = vld [vmem:[#allocation7 + $0x94] sm:$0xf]
        %v328 = vld [vmem:[#allocation7 + $0x98] sm:$0xf]
        %v329 = vld [vmem:[#allocation7 + $0x9c] sm:$0xf]
        %v330 = vld [vmem:[#allocation7 + $0xa0] sm:$0xf]
        %v331 = vld [vmem:[#allocation7 + $0xa4] sm:$0xf]
        %v332 = vld [vmem:[#allocation7 + $0xa8] sm:$0xf]
        %v333 = vld [vmem:[#allocation7 + $0xac] sm:$0xf]
        %v334 = vld [vmem:[#allocation7 + $0xb0] sm:$0xf]
        %v335 = vld [vmem:[#allocation7 + $0xb4] sm:$0xf]
        %v336 = vld [vmem:[#allocation7 + $0xb8] sm:$0xf]
        %v337 = vld [vmem:[#allocation7 + $0xbc] sm:$0xf]
        %v338 = vld [vmem:[%s4] sm:$0x1]
        %v339 = vld [vmem:[%s237] sm:$0xf]
        %v340 = vld [vmem:[%s237 + $0x4] sm:$0xf]
        %v342 = vlaneseq
        %v343 = vshrl.u32 %v342, 7
        %v344 = vsub.s32 0, %v343
        %v345 = vrot.slane %v289, %v344
        %v346 = vlaneseq
        %v347 = vshrl.u32 %v346, 7
        %v348 = vsub.s32 1, %v347
        %v349 = vrot.slane %v289, %v348
        %v354 = vunpack.c.l.b16 %v339
        %v355 = vunpack.c.l.b16 %v340
        %v356 = vpack.c.b16 %v355, %v354
        %v374 = vunpack.c.l.b16 %v273
        %v375 = vunpack.c.h.b16 %v273
        %v376 = vunpack.c.l.b16 %v274
        %v377 = vunpack.c.h.b16 %v274
        %v378 = vunpack.c.l.b16 %v275
        %v379 = vunpack.c.h.b16 %v275
        %v380 = vunpack.c.l.b16 %v276
        %v381 = vunpack.c.h.b16 %v276
        %v382 = vunpack.c.l.b16 %v277
        %v383 = vunpack.c.h.b16 %v277
        %v384 = vunpack.c.l.b16 %v278
        %v385 = vunpack.c.h.b16 %v278
        %v386 = vunpack.c.l.b16 %v279
        %v387 = vunpack.c.h.b16 %v279
        %v388 = vunpack.c.l.b16 %v280
        %v389 = vunpack.c.h.b16 %v280
        %v390 = vunpack.c.l.b16 %v281
        %v391 = vunpack.c.h.b16 %v281
        %v392 = vunpack.c.l.b16 %v282
        %v393 = vunpack.c.h.b16 %v282
        %v394 = vunpack.c.l.b16 %v283
        %v395 = vunpack.c.h.b16 %v283
        %v396 = vunpack.c.l.b16 %v284
        %v397 = vunpack.c.h.b16 %v284
        %v398 = vunpack.c.l.b16 %v285
        %v399 = vunpack.c.h.b16 %v285
        %v400 = vunpack.c.l.b16 %v286
        %v401 = vunpack.c.h.b16 %v286
        %v402 = vunpack.c.l.b16 %v287
        %v403 = vunpack.c.h.b16 %v287
        %v404 = vunpack.c.l.b16 %v288
        %v405 = vunpack.c.h.b16 %v288
        %v406 = vpack.c.b16 %v376, %v374
        %v407 = vpack.c.b16 %v377, %v375
        %v408 = vpack.c.b16 %v380, %v378
        %v409 = vpack.c.b16 %v381, %v379
        %v410 = vpack.c.b16 %v384, %v382
        %v411 = vpack.c.b16 %v385, %v383
        %v412 = vpack.c.b16 %v388, %v386
        %v413 = vpack.c.b16 %v389, %v387
        %v414 = vpack.c.b16 %v392, %v390
        %v415 = vpack.c.b16 %v393, %v391
        %v416 = vpack.c.b16 %v396, %v394
        %v417 = vpack.c.b16 %v397, %v395
        %v418 = vpack.c.b16 %v400, %v398
        %v419 = vpack.c.b16 %v401, %v399
        %v420 = vpack.c.b16 %v404, %v402
        %v421 = vpack.c.b16 %v405, %v403
        %438 = vmatprep.subr.bf16.mxu0 %v421
        %439 = vmatpush1.bf16.msra.mxu0 %v420
        %440 = vmatprep.subr.bf16.mxu0 %v419
        %441 = vmatpush1.bf16.msra.mxu0 %v418
        %442 = vmatprep.subr.bf16.mxu0 %v417
        %443 = vmatpush1.bf16.msra.mxu0 %v416
        %444 = vmatprep.subr.bf16.mxu0 %v415
        %445 = vmatpush1.bf16.msra.mxu0 %v414
        %446 = vmatprep.subr.bf16.mxu0 %v413
        %447 = vmatpush1.bf16.msra.mxu0 %v412
        %448 = vmatprep.subr.bf16.mxu0 %v411
        %449 = vmatpush1.bf16.msra.mxu0 %v410
        %450 = vmatprep.subr.bf16.mxu0 %v409
        %451 = vmatpush1.bf16.msra.mxu0 %v408
        %452 = vmatprep.subr.bf16.mxu0 %v407
        %453 = vmatpush1.bf16.msra.mxu0 %v406
        %454 = vmatprep.subr.bf16.mxu0 0
        %455 = vmatpush2.bf16.msra.mxu0 0
        %456 = vmatprep.subr.bf16.mxu0 0
        %457 = vmatpush2.bf16.msra.mxu0 0
        %458 = vmatprep.subr.bf16.mxu0 0
        %459 = vmatpush2.bf16.msra.mxu0 0
        %460 = vmatprep.subr.bf16.mxu0 0
        %461 = vmatpush2.bf16.msra.mxu0 0
        %462 = vmatprep.subr.bf16.mxu0 0
        %463 = vmatpush2.bf16.msra.mxu0 0
        %464 = vmatprep.subr.bf16.mxu0 0
        %465 = vmatpush2.bf16.msra.mxu0 0
        %466 = vmatprep.subr.bf16.mxu0 0
        %467 = vmatpush2.bf16.msra.mxu0 0
        %468 = vmatprep.subr.bf16.mxu0 0
        %469 = vmatpush2.bf16.msra.mxu0 0
        %470 = vmatprep.mubr.bf16.mxu0 0
        %471 = vmatmul.mubr.bf16.gmra.mxu0 %v356
        %v472 = vpop.f32.mrf.mxu0
        %v473 = vadd.f32 %v345, %v472
        %v474 = vpop.f32.mrf.mxu0
        %v475 = vadd.f32 %v349, %v474
        %v476 = vpop.f32.mrf.mxu0
        %v477 = vadd.f32 %v345, %v476
        %v478 = vpop.f32.mrf.mxu0
        %v479 = vadd.f32 %v349, %v478
        %480 = vdwg.mxu0
        %v481 = vmax.f32 %v473, 0.0
        %v482 = vmax.f32 %v477, 0.0
        %v483 = vpack.c.bf16 %v482, %v481
        %v485 = vrot.slane %v483, 6
        %vm486 = vcmask 1041408
        %v489 = vsel %vm486, 0, %v485
        %v491 = vrot.slane %v483, 7
        %vm492 = vcmask 1040384
        %v494 = vsel %vm492, 0, %v491
        %v497 = vlaneseq
        %v498 = vshrl.u32 %v497, 7
        %v499 = vsub.s32 0, %v498
        %v500 = vrot.slane %v338, %v499
        %v550 = vunpack.c.l.b16 %v290
        %v551 = vunpack.c.l.b16 %v291
        %v552 = vunpack.c.l.b16 %v292
        %v553 = vunpack.c.l.b16 %v293
        %v554 = vunpack.c.l.b16 %v294
        %v555 = vunpack.c.l.b16 %v295
        %v556 = vunpack.c.l.b16 %v296
        %v557 = vunpack.c.l.b16 %v297
        %v558 = vunpack.c.l.b16 %v298
        %v559 = vunpack.c.l.b16 %v299
        %v560 = vunpack.c.l.b16 %v300
        %v561 = vunpack.c.l.b16 %v301
        %v562 = vunpack.c.l.b16 %v302
        %v563 = vunpack.c.l.b16 %v303
        %v564 = vunpack.c.l.b16 %v304
        %v565 = vunpack.c.l.b16 %v305
        %v566 = vunpack.c.l.b16 %v306
        %v567 = vunpack.c.l.b16 %v307
        %v568 = vunpack.c.l.b16 %v308
        %v569 = vunpack.c.l.b16 %v309
        %v570 = vunpack.c.l.b16 %v310
        %v571 = vunpack.c.l.b16 %v311
        %v572 = vunpack.c.l.b16 %v312
        %v573 = vunpack.c.l.b16 %v313
        %v574 = vunpack.c.l.b16 %v314
        %v575 = vunpack.c.l.b16 %v315
        %v576 = vunpack.c.l.b16 %v316
        %v577 = vunpack.c.l.b16 %v317
        %v578 = vunpack.c.l.b16 %v318
        %v579 = vunpack.c.l.b16 %v319
        %v580 = vunpack.c.l.b16 %v320
        %v581 = vunpack.c.l.b16 %v321
        %v582 = vunpack.c.l.b16 %v322
        %v583 = vunpack.c.l.b16 %v323
        %v584 = vunpack.c.l.b16 %v324
        %v585 = vunpack.c.l.b16 %v325
        %v586 = vunpack.c.l.b16 %v326
        %v587 = vunpack.c.l.b16 %v327
        %v588 = vunpack.c.l.b16 %v328
        %v589 = vunpack.c.l.b16 %v329
        %v590 = vunpack.c.l.b16 %v330
        %v591 = vunpack.c.l.b16 %v331
        %v592 = vunpack.c.l.b16 %v332
        %v593 = vunpack.c.l.b16 %v333
        %v594 = vunpack.c.l.b16 %v334
        %v595 = vunpack.c.l.b16 %v335
        %v596 = vunpack.c.l.b16 %v336
        %v597 = vunpack.c.l.b16 %v337
        %v598 = vpack.c.b16 %v551, %v550
        %v599 = vpack.c.b16 %v553, %v552
        %v600 = vpack.c.b16 %v555, %v554
        %v601 = vpack.c.b16 %v557, %v556
        %v602 = vpack.c.b16 %v559, %v558
        %v603 = vpack.c.b16 %v561, %v560
        %v604 = vpack.c.b16 %v563, %v562
        %v605 = vpack.c.b16 %v565, %v564
        %v606 = vpack.c.b16 %v567, %v566
        %v607 = vpack.c.b16 %v569, %v568
        %v608 = vpack.c.b16 %v571, %v570
        %v609 = vpack.c.b16 %v573, %v572
        %v610 = vpack.c.b16 %v575, %v574
        %v611 = vpack.c.b16 %v577, %v576
        %v612 = vpack.c.b16 %v579, %v578
        %v613 = vpack.c.b16 %v581, %v580
        %v614 = vpack.c.b16 %v583, %v582
        %v615 = vpack.c.b16 %v585, %v584
        %v616 = vpack.c.b16 %v587, %v586
        %v617 = vpack.c.b16 %v589, %v588
        %v618 = vpack.c.b16 %v591, %v590
        %v619 = vpack.c.b16 %v593, %v592
        %v620 = vpack.c.b16 %v595, %v594
        %v621 = vpack.c.b16 %v597, %v596
        %646 = vmatprep.subr.bf16.mxu0 0
        %647 = vmatpush1.bf16.msra.mxu0 %v605
        %648 = vmatprep.subr.bf16.mxu0 0
        %649 = vmatpush1.bf16.msra.mxu0 %v604
        %650 = vmatprep.subr.bf16.mxu0 0
        %651 = vmatpush1.bf16.msra.mxu0 %v603
        %652 = vmatprep.subr.bf16.mxu0 0
        %653 = vmatpush1.bf16.msra.mxu0 %v602
        %654 = vmatprep.subr.bf16.mxu0 0
        %655 = vmatpush1.bf16.msra.mxu0 %v601
        %656 = vmatprep.subr.bf16.mxu0 0
        %657 = vmatpush1.bf16.msra.mxu0 %v600
        %658 = vmatprep.subr.bf16.mxu0 0
        %659 = vmatpush1.bf16.msra.mxu0 %v599
        %660 = vmatprep.subr.bf16.mxu0 0
        %661 = vmatpush1.bf16.msra.mxu0 %v598
        %662 = vmatprep.subr.bf16.mxu0 0
        %663 = vmatpush2.bf16.msra.mxu0 %v613
        %664 = vmatprep.subr.bf16.mxu0 0
        %665 = vmatpush2.bf16.msra.mxu0 %v612
        %666 = vmatprep.subr.bf16.mxu0 0
        %667 = vmatpush2.bf16.msra.mxu0 %v611
        %668 = vmatprep.subr.bf16.mxu0 0
        %669 = vmatpush2.bf16.msra.mxu0 %v610
        %670 = vmatprep.subr.bf16.mxu0 0
        %671 = vmatpush2.bf16.msra.mxu0 %v609
        %672 = vmatprep.subr.bf16.mxu0 0
        %673 = vmatpush2.bf16.msra.mxu0 %v608
        %674 = vmatprep.subr.bf16.mxu0 0
        %675 = vmatpush2.bf16.msra.mxu0 %v607
        %676 = vmatprep.subr.bf16.mxu0 0
        %677 = vmatpush2.bf16.msra.mxu0 %v606
        %678 = vmatprep.mubr.bf16.mxu0 %v494
        %679 = vmatmul.mubr.bf16.gmra.mxu0 %v489
        %v680 = vpop.f32.mrf.mxu0
        %v681 = vadd.f32 %v500, %v680
        %v682 = vpop.f32.mrf.mxu0
        %v683 = vpop.f32.mrf.mxu0
        %v684 = vadd.f32 %v500, %v683
        %v685 = vpop.f32.mrf.mxu0
        %686 = vdwg.mxu0
        %687 = vmatprep.subr.bf16.mxu0 0
        %688 = vmatpush1.bf16.msra.mxu0 %v621
        %689 = vmatprep.subr.bf16.mxu0 0
        %690 = vmatpush1.bf16.msra.mxu0 %v620
        %691 = vmatprep.subr.bf16.mxu0 0
        %692 = vmatpush1.bf16.msra.mxu0 %v619
        %693 = vmatprep.subr.bf16.mxu0 0
        %694 = vmatpush1.bf16.msra.mxu0 %v618
        %695 = vmatprep.subr.bf16.mxu0 0
        %696 = vmatpush1.bf16.msra.mxu0 %v617
        %697 = vmatprep.subr.bf16.mxu0 0
        %698 = vmatpush1.bf16.msra.mxu0 %v616
        %699 = vmatprep.subr.bf16.mxu0 0
        %700 = vmatpush1.bf16.msra.mxu0 %v615
        %701 = vmatprep.subr.bf16.mxu0 0
        %702 = vmatpush1.bf16.msra.mxu0 %v614
        %703 = vmatprep.subr.bf16.mxu0 0
        %704 = vmatpush2.bf16.msra.mxu0 0
        %705 = vmatprep.subr.bf16.mxu0 0
        %706 = vmatpush2.bf16.msra.mxu0 0
        %707 = vmatprep.subr.bf16.mxu0 0
        %708 = vmatpush2.bf16.msra.mxu0 0
        %709 = vmatprep.subr.bf16.mxu0 0
        %710 = vmatpush2.bf16.msra.mxu0 0
        %711 = vmatprep.subr.bf16.mxu0 0
        %712 = vmatpush2.bf16.msra.mxu0 0
        %713 = vmatprep.subr.bf16.mxu0 0
        %714 = vmatpush2.bf16.msra.mxu0 0
        %715 = vmatprep.subr.bf16.mxu0 0
        %716 = vmatpush2.bf16.msra.mxu0 0
        %717 = vmatprep.subr.bf16.mxu0 0
        %718 = vmatpush2.bf16.msra.mxu0 0
        %719 = vmatprep.mubr.bf16.mxu0 0
        %720 = vmatmul.mubr.bf16.gmra.mxu0 %v483
        %v721 = vpop.f32.mrf.mxu0
        %v722 = vadd.f32 %v681, %v721
        %v723 = vpop.f32.mrf.mxu0
        %v724 = vpop.f32.mrf.mxu0
        %v725 = vadd.f32 %v684, %v724
        %v726 = vpop.f32.mrf.mxu0
        %727 = vdwg.mxu0
        %v728 = vmax.f32 %v722, 0.0
        %v729 = vmax.f32 %v725, 0.0
        %v730 = vadd.f32 %v728, %v475
        %v731 = vadd.f32 %v729, %v479
        %v732 = vmax.f32 %v730, 0.0
        %v733 = vmax.f32 %v731, 0.0
        %v734 = vpack.c.bf16 %v733, %v732
        %v736 = vunpack.c.l.b16 %v734
        %v737 = vunpack.c.h.b16 %v734
        %v738 = vpack.c.b16 %v736, %v736
        %v739 = vpack.c.b16 %v737, %v737
        %742 = vst [vmem:[%s271] sm:$0xf] %v738
        %743 = vst [vmem:[%s271 + $0x4] sm:$0xf] %v739
        %s744 = sand.u32 %s141, 1
        %s745 = scalar_lea.sflag [#allocation4], %s744
        %s746 = sand.u32 %s141, 1
        %s747 = smul.addr %s746, 8
        %s748 = scalar_lea.vmem [#allocation8], %s747
        // Predicated region
        $region53: #{tpu_custom_call.1} parent=39 // pred_check
          %p749 = pneg %p151
        $region54: #{tpu_custom_call.1} parent=39 // pred_check_branch
          %751 = sbr.rel (%p749) target = $region56
        $region55: #{tpu_custom_call.1} parent=39 // pred_region
          %s753 = ssub.s32 128, 128
          %754 = vsyncadd %s745, %s753
          %s755 = smul.addr %s23, 2
          %s756 = smul.addr %s755, 64
          %s757 = scalar_lea.hbm %s5, %s756
          %s758 = sshll.u32 %s748, 4
          %s759 = int_to_ptr.vmem [resolvable:$true] %s758
          %764 = dma.vmem_to_hbm [thread:$0]  %s759, 128, %s757, %s745, 64, 64, 4
        $region56: #{tpu_custom_call.1} parent=39 // pred_fallthru
          _
      $region40: #{tpu_custom_call.1} parent=5 // pred_fallthru
        _
      %p765 = scmp.le.s32.totalorder 2, %s18
      // Predicated region
      $region57: #{tpu_custom_call.1} parent=5 // pred_check
        %p766 = pneg %p765
      $region58: #{tpu_custom_call.1} parent=5 // pred_check_branch
        %768 = sbr.rel (%p766) target = $region60
      $region59: #{tpu_custom_call.1} parent=5 // pred_region
        %s769 = ssub.s32 %s18, 2
        // Predicated region
        $region61: #{tpu_custom_call.1} parent=59 // pred_check
          %p770 = pneg %p157
        $region62: #{tpu_custom_call.1} parent=59 // pred_check_branch
          %772 = sbr.rel (%p770) target = $region64
        $region63: #{tpu_custom_call.1} parent=59 // pred_region
          %s773 = sand.u32 %s142, 1
          %s774 = scalar_lea.sflag [#allocation4], %s773
          %s775 = sand.u32 %s142, 1
          %s776 = smul.addr %s775, 8
          %s777 = scalar_lea.vmem [#allocation8], %s776
          %778 = dma.done %s774, 128
        $region64: #{tpu_custom_call.1} parent=59 // pred_fallthru
          _
      $region60: #{tpu_custom_call.1} parent=5 // pred_fallthru
        _
    $region6: #{tpu_custom_call.1} parent=1 // loop_footer
      %s22 = sadd.s32 1, %s18
    $region7: #{tpu_custom_call.1} parent=1 // loop_footer_branch
      %17 = sbr.rel target = $region3
    $region8: #{tpu_custom_call.1} parent=1 // loop_exit
      _
    %779 = vsyncpa [#allocation3], 1
    %s780 = scalar_lea.sflag [#allocation3], 1
    %781 = vsyncpa %s780, 1
    %782 = vsyncpa [#allocation6], 1
    %783 = vsyncpa [#allocation4], 1
    %s784 = scalar_lea.sflag [#allocation4], 1
    %785 = vsyncpa %s784, 1

</llo_original>
